<compile_context>
chip_gen: v5e
topology: v5e:2x2
jax: 0.10.0
libtpu: 0.0.40
codegen_flags: <defaults>
</compile_context>

<pallas_src>
import numpy as np
import jax
import jax.numpy as jnp
from jax import lax
from jax.experimental import pallas as pl
from jax.experimental.pallas import tpu as pltpu


def _viterbi_kernel(feats_ref, len_ref, trans_ref, out_ref, bp_ref):
    # feats_ref : (S, T, Bb) f32   emission scores, batch on lanes
    # len_ref   : (1, Bb)    i32   per-sequence lengths (contiguous-prefix mask)
    # trans_ref : (T, T, 1)  f32   transitions[i, j] = score(from i -> to j)
    # out_ref   : (S, 1, Bb) i32   decoded tag indices (seq-major, batch on lanes)
    # bp_ref    : (S, T, Bb) i32   backpointer scratch
    S, T, Bb = feats_ref.shape
    START = T - 2  # START_TAG = -2
    STOP = T - 1   # STOP_TAG  = -1

    # ---- hoisted loop invariants (JAX does not CSE broadcast_in_dim) -------
    trans_3d = jnp.broadcast_to(trans_ref[...], (T, T, Bb))   # (T_from, T_to, Bb)
    i_iota = lax.broadcasted_iota(jnp.int32, (T, T, Bb), 0)   # source-tag index
    j_iota = lax.broadcasted_iota(jnp.int32, (T, Bb), 0)      # tag index on sublanes
    len_vec = len_ref[...]                                    # (1, Bb)
    last_row = len_vec - 1                                    # (1, Bb)

    # ---- init: partition_0[j, b] = feats[0, j, b] + transitions[START, j] --
    partition0 = feats_ref[0] + trans_3d[START]               # (T, Bb)

    # ---- forward max-product recursion --------------------------------------
    def fwd_body(idx, carry):
        part, last_part = carry
        # cur[i, j, b] = trans[i, j] + partition[i, b]; reductions over the
        # leading (untiled) axis lower to elementwise VPU ops over T slabs.
        cur = trans_3d + part[:, None, :]                     # (T, T, Bb)
        best = jnp.max(cur, axis=0)                           # (T, Bb)
        is_max = cur == best[None, :, :]
        # first-occurrence argmax (matches numpy; torch tie-break unspecified)
        bp = jnp.min(jnp.where(is_max, i_iota, T), axis=0)    # (T, Bb) i32
        new_part = feats_ref[idx] + best                      # (T, Bb)
        m_t = idx < len_vec                                   # (1, Bb) bool
        bp_ref[idx - 1] = jnp.where(m_t, bp, 0)
        # carry partition at position length-1 (replaces ph_scratch + gather)
        new_last = jnp.where(m_t, new_part, last_part)
        return new_part, new_last

    _, last_part = lax.fori_loop(1, S, fwd_body, (partition0, partition0),
                                 unroll=True)

    # ---- final transition into STOP: only the STOP column is needed --------
    cand = trans_3d[:, STOP:STOP + 1, :] + last_part[:, None, :]   # (T, 1, Bb)
    best_last = jnp.max(cand, axis=0)                              # (1, Bb)
    is_max_l = cand == best_last[None, :, :]
    pointer = jnp.min(jnp.where(is_max_l, i_iota[:, STOP:STOP + 1, :], T),
                      axis=0)                                      # (1, Bb) i32

    out_ref[S - 1] = pointer

    # ---- backtrace (torch's scatter at row length-1 is folded in here) -----
    def back_body(k, ptr):
        idx = S - 2 - k
        bp_t = bp_ref[idx]                                         # (T, Bb)
        onehot = j_iota == ptr                                     # (T, Bb)
        gathered = jnp.sum(jnp.where(onehot, bp_t, 0), axis=0,
                           keepdims=True)                          # (1, Bb)
        new_ptr = jnp.where(idx == last_row, pointer, gathered)
        out_ref[idx] = new_ptr
        return new_ptr

    lax.fori_loop(0, S - 1, back_body, pointer, unroll=True)


def _vmem_estimate_bytes(S, T, Bb):
    sub_t = -(-T // 8) * 8
    lanes = -(-Bb // 128) * 128
    feats_b = S * sub_t * lanes * 4 * 2        # double-buffered feats block
    bp_b = S * sub_t * lanes * 4               # backpointer scratch
    out_b = S * 8 * lanes * 4 * 2              # (S,1,Bb) output block
    work = 24 * sub_t * lanes * 4              # trans_3d, iotas, carries, temps
    return feats_b + bp_b + out_b + work


def crf_forward(feats, mask, transitions):
    """Mirrors CRF.forward: returns (path_score=None, best_path (B, S) int32).

    Assumes every sequence has length >= 1 and the mask is a contiguous
    prefix of ones (same standard assumption as the torch module).
    """
    B, S, T = feats.shape
    feats_stb = jnp.transpose(feats, (1, 2, 0)).astype(jnp.float32)     # (S, T, B)
    lengths = jnp.sum(mask.astype(jnp.int32), axis=1)[None, :]          # (1, B)
    trans3 = transitions.astype(jnp.float32)[:, :, None]                # (T, T, 1)

    # Batch tiling: lane-dense blocks; a >1 grid lets v7x's two TensorCores
    # split the batch ("parallel"); harmless single-program grid otherwise.
    bt = 128 if (B % 128 == 0) else B
    grid = (B // bt,)

    cp_kwargs = {"dimension_semantics": ("parallel",)}
    est = _vmem_estimate_bytes(S, T, bt)
    if est > 12 * 1024 * 1024:
        # Raise scoped VMEM for the all-resident design (v5e default is 16 MiB).
        cp_kwargs["vmem_limit_bytes"] = min(int(est * 5) // 4, 96 * 1024 * 1024)

    out = pl.pallas_call(
        _viterbi_kernel,
        out_shape=jax.ShapeDtypeStruct((S, 1, B), jnp.int32),
        grid=grid,
        in_specs=[
            pl.BlockSpec((S, T, bt), lambda b: (0, 0, b)),
            pl.BlockSpec((1, bt), lambda b: (0, b)),
            pl.BlockSpec((T, T, 1), lambda b: (0, 0, 0)),
        ],
        out_specs=pl.BlockSpec((S, 1, bt), lambda b: (0, 0, b)),
        scratch_shapes=[pltpu.VMEM((S, T, bt), jnp.int32)],
        compiler_params=pltpu.CompilerParams(**cp_kwargs),
    )(feats_stb, lengths, trans3)

    decode_idx = jnp.transpose(out[:, 0, :], (1, 0))  # (B, S)
    # TODO(synk): torch returns path_score=None in _viterbi_decode; nothing to compute.
    return None, decode_idx


# ---------------- pure-numpy reference (mirrors the torch code) -------------
def _viterbi_ref(feats, mask, trans):
    feats = np.asarray(feats, np.float32)
    mask = np.asarray(mask, np.float32)
    trans = np.asarray(trans, np.float32)
    B, S, T = feats.shape
    lengths = mask.astype(np.int64).sum(axis=1)
    partition = feats[:, 0, :] + trans[T - 2, :][None, :]
    ph, bps = [partition], []
    for t in range(1, S):
        cur = feats[:, t, :][:, None, :] + trans[None, :, :] + partition[:, :, None]
        partition = cur.max(axis=1)
        bp = cur.argmax(axis=1)
        bp = np.where(mask[:, t][:, None] > 0, bp, 0)
        ph.append(partition)
        bps.append(bp)
    bps.append(np.zeros((B, T), dtype=np.int64))
    ph = np.stack(ph, axis=0)      # (S, B, T)
    bps = np.stack(bps, axis=0)    # (S, B, T)
    last_partition = ph[lengths - 1, np.arange(B), :]
    last_values = last_partition[:, :, None] + trans[None, :, :]
    last_bp = last_values.argmax(axis=1)
    pointer = last_bp[:, T - 1]
    bps[lengths - 1, np.arange(B), :] = pointer[:, None]
    decode = np.zeros((S, B), dtype=np.int64)
    decode[S - 1] = pointer
    for idx in range(S - 2, -1, -1):
        pointer = bps[idx, np.arange(B), pointer]
        decode[idx] = pointer
    return decode.T  # (B, S)


if __name__ == "__main__":
    key = jax.random.PRNGKey(0)
    k1, k2 = jax.random.split(key)

    B, S, tag_set_size = 2, 8, 4
    T = tag_set_size + 2  # +START, +STOP

    feats = jax.random.normal(k1, (B, S, T), dtype=jnp.float32)
    # module inits transitions to zeros; use small deterministic random values
    # so the transition term actually exercises the kernel
    transitions = 0.1 * jax.random.normal(k2, (T, T), dtype=jnp.float32)

    lengths = jnp.array([S, 5], dtype=jnp.int32)
    mask = (jnp.arange(S)[None, :] < lengths[:, None]).astype(jnp.float32)  # (B, S)

    path_score, best_path = crf_forward(feats, mask, transitions)
    best_path = jax.block_until_ready(best_path)

    ref = _viterbi_ref(feats, mask, transitions)
    np.testing.assert_array_equal(np.asarray(best_path, np.int64), ref)
    assert path_score is None

    print("KERNEL_OK")
</pallas_src>

<mosaic_0001>
module attributes {stable_mosaic.version = 11 : i64} {
  func.func @_viterbi_kernel(%arg0: i32, %arg1: memref<8x6x2xf32, #tpu.memory_space<vmem>>, %arg2: memref<1x2xi32, #tpu.memory_space<vmem>>, %arg3: memref<6x6x1xf32, #tpu.memory_space<vmem>>, %arg4: memref<8x1x2xi32, #tpu.memory_space<vmem>>, %arg5: memref<8x6x2xi32, #tpu.memory_space<vmem>>) attributes {dimension_semantics = [#tpu.dimension_semantics<parallel>], iteration_bounds = array<i64: 1>, scalar_prefetch = 0 : i64, scratch_operands = 1 : i64, tpu.core_type = #tpu.core_type<tc>, window_params = [{transform_indices = @transform_0, window_bounds = array<i64: 8, 6, 2>}, {transform_indices = @transform_1, window_bounds = array<i64: 1, 2>}, {pipeline_mode = #tpu.pipeline_mode<synchronous>, transform_indices = @transform_2, window_bounds = array<i64: 6, 6, 1>}, {transform_indices = @transform_3, window_bounds = array<i64: 8, 1, 2>}]} {
    %c0 = arith.constant 0 : index
    %c0_0 = arith.constant 0 : index
    %c0_1 = arith.constant 0 : index
    %0 = vector.load %arg3[%c0, %c0_0, %c0_1] : memref<6x6x1xf32, #tpu.memory_space<vmem>>, vector<6x6x1xf32>
    %1 = vector.shape_cast %0 : vector<6x6x1xf32> to vector<6x6x1xf32>
    %2 = vector.broadcast %1 : vector<6x6x1xf32> to vector<6x6x2xf32>
    %3 = tpu.iota {dimensions = array<i32: 0>} : vector<6x6x2xi32>
    %4 = tpu.iota {dimensions = array<i32: 0>} : vector<6x2xi32>
    %c0_2 = arith.constant 0 : index
    %c0_3 = arith.constant 0 : index
    %5 = vector.load %arg2[%c0_2, %c0_3] : memref<1x2xi32, #tpu.memory_space<vmem>>, vector<1x2xi32>
    %c1_i32 = arith.constant 1 : i32
    %6 = vector.broadcast %c1_i32 : i32 to vector<1x2xi32>
    %7 = arith.subi %5, %6 : vector<1x2xi32>
    %c0_4 = arith.constant 0 : index
    %c0_5 = arith.constant 0 : index
    %c0_6 = arith.constant 0 : index
    %8 = vector.load %arg1[%c0_4, %c0_5, %c0_6] : memref<8x6x2xf32, #tpu.memory_space<vmem>>, vector<1x6x2xf32>
    %9 = vector.shape_cast %8 : vector<1x6x2xf32> to vector<6x2xf32>
    %10 = vector.extract_strided_slice %2 {offsets = [4, 0, 0], sizes = [1, 6, 2], strides = [1, 1, 1]} : vector<6x6x2xf32> to vector<1x6x2xf32>
    %11 = vector.shape_cast %10 : vector<1x6x2xf32> to vector<6x2xf32>
    %12 = arith.addf %9, %11 : vector<6x2xf32>
    %c1_i32_7 = arith.constant 1 : i32
    %13 = vector.shape_cast %12 : vector<6x2xf32> to vector<6x1x2xf32>
    %14 = vector.broadcast %13 : vector<6x1x2xf32> to vector<6x6x2xf32>
    %15 = arith.addf %2, %14 : vector<6x6x2xf32>
    %cst = arith.constant dense<0xFF800000> : vector<6x2xf32>
    %16 = vector.multi_reduction <maximumf>, %15, %cst [0] : vector<6x6x2xf32> to vector<6x2xf32>
    %17 = vector.shape_cast %16 : vector<6x2xf32> to vector<1x6x2xf32>
    %18 = vector.broadcast %17 : vector<1x6x2xf32> to vector<6x6x2xf32>
    %19 = arith.cmpf oeq, %15, %18 : vector<6x6x2xf32>
    %c6_i32 = arith.constant 6 : i32
    %20 = vector.broadcast %c6_i32 : i32 to vector<6x6x2xi32>
    %21 = arith.select %19, %3, %20 : vector<6x6x2xi1>, vector<6x6x2xi32>
    %cst_8 = arith.constant dense<2147483647> : vector<6x2xi32>
    %22 = vector.multi_reduction <minsi>, %21, %cst_8 [0] : vector<6x6x2xi32> to vector<6x2xi32>
    %23 = arith.index_cast %c1_i32_7 : i32 to index
    %c0_9 = arith.constant 0 : index
    %c0_10 = arith.constant 0 : index
    %24 = vector.load %arg1[%23, %c0_9, %c0_10] : memref<8x6x2xf32, #tpu.memory_space<vmem>>, vector<1x6x2xf32>
    %25 = vector.shape_cast %24 : vector<1x6x2xf32> to vector<6x2xf32>
    %26 = arith.addf %25, %16 : vector<6x2xf32>
    %27 = vector.broadcast %c1_i32_7 : i32 to vector<1x2xi32>
    %28 = arith.cmpi slt, %27, %5 : vector<1x2xi32>
    %c0_i32 = arith.constant 0 : i32
    %29 = vector.shape_cast %28 : vector<1x2xi1> to vector<1x2xi1>
    %30 = vector.broadcast %29 : vector<1x2xi1> to vector<6x2xi1>
    %31 = vector.broadcast %c0_i32 : i32 to vector<6x2xi32>
    %32 = arith.select %30, %22, %31 : vector<6x2xi1>, vector<6x2xi32>
    %c1_i32_11 = arith.constant 1 : i32
    %33 = arith.subi %c1_i32_7, %c1_i32_11 : i32
    %34 = arith.index_cast %33 : i32 to index
    %c0_12 = arith.constant 0 : index
    %c0_13 = arith.constant 0 : index
    %35 = vector.load %arg5[%34, %c0_12, %c0_13] : memref<8x6x2xi32, #tpu.memory_space<vmem>>, vector<1x6x2xi32>
    %36 = vector.shape_cast %35 : vector<1x6x2xi32> to vector<6x2xi32>
    %37 = vector.shape_cast %32 : vector<6x2xi32> to vector<1x6x2xi32>
    tpu.vector_store %arg5[%34, %c0_12, %c0_13], %37 {strides = array<i32>} : memref<8x6x2xi32, #tpu.memory_space<vmem>>, vector<1x6x2xi32>,
    %38 = vector.shape_cast %28 : vector<1x2xi1> to vector<1x2xi1>
    %39 = vector.broadcast %38 : vector<1x2xi1> to vector<6x2xi1>
    %40 = arith.select %39, %26, %12 : vector<6x2xi1>, vector<6x2xf32>
    %c2_i32 = arith.constant 2 : i32
    %41 = vector.shape_cast %26 : vector<6x2xf32> to vector<6x1x2xf32>
    %42 = vector.broadcast %41 : vector<6x1x2xf32> to vector<6x6x2xf32>
    %43 = arith.addf %2, %42 : vector<6x6x2xf32>
    %cst_14 = arith.constant dense<0xFF800000> : vector<6x2xf32>
    %44 = vector.multi_reduction <maximumf>, %43, %cst_14 [0] : vector<6x6x2xf32> to vector<6x2xf32>
    %45 = vector.shape_cast %44 : vector<6x2xf32> to vector<1x6x2xf32>
    %46 = vector.broadcast %45 : vector<1x6x2xf32> to vector<6x6x2xf32>
    %47 = arith.cmpf oeq, %43, %46 : vector<6x6x2xf32>
    %c6_i32_15 = arith.constant 6 : i32
    %48 = vector.broadcast %c6_i32_15 : i32 to vector<6x6x2xi32>
    %49 = arith.select %47, %3, %48 : vector<6x6x2xi1>, vector<6x6x2xi32>
    %cst_16 = arith.constant dense<2147483647> : vector<6x2xi32>
    %50 = vector.multi_reduction <minsi>, %49, %cst_16 [0] : vector<6x6x2xi32> to vector<6x2xi32>
    %51 = arith.index_cast %c2_i32 : i32 to index
    %c0_17 = arith.constant 0 : index
    %c0_18 = arith.constant 0 : index
    %52 = vector.load %arg1[%51, %c0_17, %c0_18] : memref<8x6x2xf32, #tpu.memory_space<vmem>>, vector<1x6x2xf32>
    %53 = vector.shape_cast %52 : vector<1x6x2xf32> to vector<6x2xf32>
    %54 = arith.addf %53, %44 : vector<6x2xf32>
    %55 = vector.broadcast %c2_i32 : i32 to vector<1x2xi32>
    %56 = arith.cmpi slt, %55, %5 : vector<1x2xi32>
    %c0_i32_19 = arith.constant 0 : i32
    %57 = vector.shape_cast %56 : vector<1x2xi1> to vector<1x2xi1>
    %58 = vector.broadcast %57 : vector<1x2xi1> to vector<6x2xi1>
    %59 = vector.broadcast %c0_i32_19 : i32 to vector<6x2xi32>
    %60 = arith.select %58, %50, %59 : vector<6x2xi1>, vector<6x2xi32>
    %c1_i32_20 = arith.constant 1 : i32
    %61 = arith.subi %c2_i32, %c1_i32_20 : i32
    %62 = arith.index_cast %61 : i32 to index
    %c0_21 = arith.constant 0 : index
    %c0_22 = arith.constant 0 : index
    %63 = vector.load %arg5[%62, %c0_21, %c0_22] : memref<8x6x2xi32, #tpu.memory_space<vmem>>, vector<1x6x2xi32>
    %64 = vector.shape_cast %63 : vector<1x6x2xi32> to vector<6x2xi32>
    %65 = vector.shape_cast %60 : vector<6x2xi32> to vector<1x6x2xi32>
    tpu.vector_store %arg5[%62, %c0_21, %c0_22], %65 {strides = array<i32>} : memref<8x6x2xi32, #tpu.memory_space<vmem>>, vector<1x6x2xi32>,
    %66 = vector.shape_cast %56 : vector<1x2xi1> to vector<1x2xi1>
    %67 = vector.broadcast %66 : vector<1x2xi1> to vector<6x2xi1>
    %68 = arith.select %67, %54, %40 : vector<6x2xi1>, vector<6x2xf32>
    %c3_i32 = arith.constant 3 : i32
    %69 = vector.shape_cast %54 : vector<6x2xf32> to vector<6x1x2xf32>
    %70 = vector.broadcast %69 : vector<6x1x2xf32> to vector<6x6x2xf32>
    %71 = arith.addf %2, %70 : vector<6x6x2xf32>
    %cst_23 = arith.constant dense<0xFF800000> : vector<6x2xf32>
    %72 = vector.multi_reduction <maximumf>, %71, %cst_23 [0] : vector<6x6x2xf32> to vector<6x2xf32>
    %73 = vector.shape_cast %72 : vector<6x2xf32> to vector<1x6x2xf32>
    %74 = vector.broadcast %73 : vector<1x6x2xf32> to vector<6x6x2xf32>
    %75 = arith.cmpf oeq, %71, %74 : vector<6x6x2xf32>
    %c6_i32_24 = arith.constant 6 : i32
    %76 = vector.broadcast %c6_i32_24 : i32 to vector<6x6x2xi32>
    %77 = arith.select %75, %3, %76 : vector<6x6x2xi1>, vector<6x6x2xi32>
    %cst_25 = arith.constant dense<2147483647> : vector<6x2xi32>
    %78 = vector.multi_reduction <minsi>, %77, %cst_25 [0] : vector<6x6x2xi32> to vector<6x2xi32>
    %79 = arith.index_cast %c3_i32 : i32 to index
    %c0_26 = arith.constant 0 : index
    %c0_27 = arith.constant 0 : index
    %80 = vector.load %arg1[%79, %c0_26, %c0_27] : memref<8x6x2xf32, #tpu.memory_space<vmem>>, vector<1x6x2xf32>
    %81 = vector.shape_cast %80 : vector<1x6x2xf32> to vector<6x2xf32>
    %82 = arith.addf %81, %72 : vector<6x2xf32>
    %83 = vector.broadcast %c3_i32 : i32 to vector<1x2xi32>
    %84 = arith.cmpi slt, %83, %5 : vector<1x2xi32>
    %c0_i32_28 = arith.constant 0 : i32
    %85 = vector.shape_cast %84 : vector<1x2xi1> to vector<1x2xi1>
    %86 = vector.broadcast %85 : vector<1x2xi1> to vector<6x2xi1>
    %87 = vector.broadcast %c0_i32_28 : i32 to vector<6x2xi32>
    %88 = arith.select %86, %78, %87 : vector<6x2xi1>, vector<6x2xi32>
    %c1_i32_29 = arith.constant 1 : i32
    %89 = arith.subi %c3_i32, %c1_i32_29 : i32
    %90 = arith.index_cast %89 : i32 to index
    %c0_30 = arith.constant 0 : index
    %c0_31 = arith.constant 0 : index
    %91 = vector.load %arg5[%90, %c0_30, %c0_31] : memref<8x6x2xi32, #tpu.memory_space<vmem>>, vector<1x6x2xi32>
    %92 = vector.shape_cast %91 : vector<1x6x2xi32> to vector<6x2xi32>
    %93 = vector.shape_cast %88 : vector<6x2xi32> to vector<1x6x2xi32>
    tpu.vector_store %arg5[%90, %c0_30, %c0_31], %93 {strides = array<i32>} : memref<8x6x2xi32, #tpu.memory_space<vmem>>, vector<1x6x2xi32>,
    %94 = vector.shape_cast %84 : vector<1x2xi1> to vector<1x2xi1>
    %95 = vector.broadcast %94 : vector<1x2xi1> to vector<6x2xi1>
    %96 = arith.select %95, %82, %68 : vector<6x2xi1>, vector<6x2xf32>
    %c4_i32 = arith.constant 4 : i32
    %97 = vector.shape_cast %82 : vector<6x2xf32> to vector<6x1x2xf32>
    %98 = vector.broadcast %97 : vector<6x1x2xf32> to vector<6x6x2xf32>
    %99 = arith.addf %2, %98 : vector<6x6x2xf32>
    %cst_32 = arith.constant dense<0xFF800000> : vector<6x2xf32>
    %100 = vector.multi_reduction <maximumf>, %99, %cst_32 [0] : vector<6x6x2xf32> to vector<6x2xf32>
    %101 = vector.shape_cast %100 : vector<6x2xf32> to vector<1x6x2xf32>
    %102 = vector.broadcast %101 : vector<1x6x2xf32> to vector<6x6x2xf32>
    %103 = arith.cmpf oeq, %99, %102 : vector<6x6x2xf32>
    %c6_i32_33 = arith.constant 6 : i32
    %104 = vector.broadcast %c6_i32_33 : i32 to vector<6x6x2xi32>
    %105 = arith.select %103, %3, %104 : vector<6x6x2xi1>, vector<6x6x2xi32>
    %cst_34 = arith.constant dense<2147483647> : vector<6x2xi32>
    %106 = vector.multi_reduction <minsi>, %105, %cst_34 [0] : vector<6x6x2xi32> to vector<6x2xi32>
    %107 = arith.index_cast %c4_i32 : i32 to index
    %c0_35 = arith.constant 0 : index
    %c0_36 = arith.constant 0 : index
    %108 = vector.load %arg1[%107, %c0_35, %c0_36] : memref<8x6x2xf32, #tpu.memory_space<vmem>>, vector<1x6x2xf32>
    %109 = vector.shape_cast %108 : vector<1x6x2xf32> to vector<6x2xf32>
    %110 = arith.addf %109, %100 : vector<6x2xf32>
    %111 = vector.broadcast %c4_i32 : i32 to vector<1x2xi32>
    %112 = arith.cmpi slt, %111, %5 : vector<1x2xi32>
    %c0_i32_37 = arith.constant 0 : i32
    %113 = vector.shape_cast %112 : vector<1x2xi1> to vector<1x2xi1>
    %114 = vector.broadcast %113 : vector<1x2xi1> to vector<6x2xi1>
    %115 = vector.broadcast %c0_i32_37 : i32 to vector<6x2xi32>
    %116 = arith.select %114, %106, %115 : vector<6x2xi1>, vector<6x2xi32>
    %c1_i32_38 = arith.constant 1 : i32
    %117 = arith.subi %c4_i32, %c1_i32_38 : i32
    %118 = arith.index_cast %117 : i32 to index
    %c0_39 = arith.constant 0 : index
    %c0_40 = arith.constant 0 : index
    %119 = vector.load %arg5[%118, %c0_39, %c0_40] : memref<8x6x2xi32, #tpu.memory_space<vmem>>, vector<1x6x2xi32>
    %120 = vector.shape_cast %119 : vector<1x6x2xi32> to vector<6x2xi32>
    %121 = vector.shape_cast %116 : vector<6x2xi32> to vector<1x6x2xi32>
    tpu.vector_store %arg5[%118, %c0_39, %c0_40], %121 {strides = array<i32>} : memref<8x6x2xi32, #tpu.memory_space<vmem>>, vector<1x6x2xi32>,
    %122 = vector.shape_cast %112 : vector<1x2xi1> to vector<1x2xi1>
    %123 = vector.broadcast %122 : vector<1x2xi1> to vector<6x2xi1>
    %124 = arith.select %123, %110, %96 : vector<6x2xi1>, vector<6x2xf32>
    %c5_i32 = arith.constant 5 : i32
    %125 = vector.shape_cast %110 : vector<6x2xf32> to vector<6x1x2xf32>
    %126 = vector.broadcast %125 : vector<6x1x2xf32> to vector<6x6x2xf32>
    %127 = arith.addf %2, %126 : vector<6x6x2xf32>
    %cst_41 = arith.constant dense<0xFF800000> : vector<6x2xf32>
    %128 = vector.multi_reduction <maximumf>, %127, %cst_41 [0] : vector<6x6x2xf32> to vector<6x2xf32>
    %129 = vector.shape_cast %128 : vector<6x2xf32> to vector<1x6x2xf32>
    %130 = vector.broadcast %129 : vector<1x6x2xf32> to vector<6x6x2xf32>
    %131 = arith.cmpf oeq, %127, %130 : vector<6x6x2xf32>
    %c6_i32_42 = arith.constant 6 : i32
    %132 = vector.broadcast %c6_i32_42 : i32 to vector<6x6x2xi32>
    %133 = arith.select %131, %3, %132 : vector<6x6x2xi1>, vector<6x6x2xi32>
    %cst_43 = arith.constant dense<2147483647> : vector<6x2xi32>
    %134 = vector.multi_reduction <minsi>, %133, %cst_43 [0] : vector<6x6x2xi32> to vector<6x2xi32>
    %135 = arith.index_cast %c5_i32 : i32 to index
    %c0_44 = arith.constant 0 : index
    %c0_45 = arith.constant 0 : index
    %136 = vector.load %arg1[%135, %c0_44, %c0_45] : memref<8x6x2xf32, #tpu.memory_space<vmem>>, vector<1x6x2xf32>
    %137 = vector.shape_cast %136 : vector<1x6x2xf32> to vector<6x2xf32>
    %138 = arith.addf %137, %128 : vector<6x2xf32>
    %139 = vector.broadcast %c5_i32 : i32 to vector<1x2xi32>
    %140 = arith.cmpi slt, %139, %5 : vector<1x2xi32>
    %c0_i32_46 = arith.constant 0 : i32
    %141 = vector.shape_cast %140 : vector<1x2xi1> to vector<1x2xi1>
    %142 = vector.broadcast %141 : vector<1x2xi1> to vector<6x2xi1>
    %143 = vector.broadcast %c0_i32_46 : i32 to vector<6x2xi32>
    %144 = arith.select %142, %134, %143 : vector<6x2xi1>, vector<6x2xi32>
    %c1_i32_47 = arith.constant 1 : i32
    %145 = arith.subi %c5_i32, %c1_i32_47 : i32
    %146 = arith.index_cast %145 : i32 to index
    %c0_48 = arith.constant 0 : index
    %c0_49 = arith.constant 0 : index
    %147 = vector.load %arg5[%146, %c0_48, %c0_49] : memref<8x6x2xi32, #tpu.memory_space<vmem>>, vector<1x6x2xi32>
    %148 = vector.shape_cast %147 : vector<1x6x2xi32> to vector<6x2xi32>
    %149 = vector.shape_cast %144 : vector<6x2xi32> to vector<1x6x2xi32>
    tpu.vector_store %arg5[%146, %c0_48, %c0_49], %149 {strides = array<i32>} : memref<8x6x2xi32, #tpu.memory_space<vmem>>, vector<1x6x2xi32>,
    %150 = vector.shape_cast %140 : vector<1x2xi1> to vector<1x2xi1>
    %151 = vector.broadcast %150 : vector<1x2xi1> to vector<6x2xi1>
    %152 = arith.select %151, %138, %124 : vector<6x2xi1>, vector<6x2xf32>
    %c6_i32_50 = arith.constant 6 : i32
    %153 = vector.shape_cast %138 : vector<6x2xf32> to vector<6x1x2xf32>
    %154 = vector.broadcast %153 : vector<6x1x2xf32> to vector<6x6x2xf32>
    %155 = arith.addf %2, %154 : vector<6x6x2xf32>
    %cst_51 = arith.constant dense<0xFF800000> : vector<6x2xf32>
    %156 = vector.multi_reduction <maximumf>, %155, %cst_51 [0] : vector<6x6x2xf32> to vector<6x2xf32>
    %157 = vector.shape_cast %156 : vector<6x2xf32> to vector<1x6x2xf32>
    %158 = vector.broadcast %157 : vector<1x6x2xf32> to vector<6x6x2xf32>
    %159 = arith.cmpf oeq, %155, %158 : vector<6x6x2xf32>
    %c6_i32_52 = arith.constant 6 : i32
    %160 = vector.broadcast %c6_i32_52 : i32 to vector<6x6x2xi32>
    %161 = arith.select %159, %3, %160 : vector<6x6x2xi1>, vector<6x6x2xi32>
    %cst_53 = arith.constant dense<2147483647> : vector<6x2xi32>
    %162 = vector.multi_reduction <minsi>, %161, %cst_53 [0] : vector<6x6x2xi32> to vector<6x2xi32>
    %163 = arith.index_cast %c6_i32_50 : i32 to index
    %c0_54 = arith.constant 0 : index
    %c0_55 = arith.constant 0 : index
    %164 = vector.load %arg1[%163, %c0_54, %c0_55] : memref<8x6x2xf32, #tpu.memory_space<vmem>>, vector<1x6x2xf32>
    %165 = vector.shape_cast %164 : vector<1x6x2xf32> to vector<6x2xf32>
    %166 = arith.addf %165, %156 : vector<6x2xf32>
    %167 = vector.broadcast %c6_i32_50 : i32 to vector<1x2xi32>
    %168 = arith.cmpi slt, %167, %5 : vector<1x2xi32>
    %c0_i32_56 = arith.constant 0 : i32
    %169 = vector.shape_cast %168 : vector<1x2xi1> to vector<1x2xi1>
    %170 = vector.broadcast %169 : vector<1x2xi1> to vector<6x2xi1>
    %171 = vector.broadcast %c0_i32_56 : i32 to vector<6x2xi32>
    %172 = arith.select %170, %162, %171 : vector<6x2xi1>, vector<6x2xi32>
    %c1_i32_57 = arith.constant 1 : i32
    %173 = arith.subi %c6_i32_50, %c1_i32_57 : i32
    %174 = arith.index_cast %173 : i32 to index
    %c0_58 = arith.constant 0 : index
    %c0_59 = arith.constant 0 : index
    %175 = vector.load %arg5[%174, %c0_58, %c0_59] : memref<8x6x2xi32, #tpu.memory_space<vmem>>, vector<1x6x2xi32>
    %176 = vector.shape_cast %175 : vector<1x6x2xi32> to vector<6x2xi32>
    %177 = vector.shape_cast %172 : vector<6x2xi32> to vector<1x6x2xi32>
    tpu.vector_store %arg5[%174, %c0_58, %c0_59], %177 {strides = array<i32>} : memref<8x6x2xi32, #tpu.memory_space<vmem>>, vector<1x6x2xi32>,
    %178 = vector.shape_cast %168 : vector<1x2xi1> to vector<1x2xi1>
    %179 = vector.broadcast %178 : vector<1x2xi1> to vector<6x2xi1>
    %180 = arith.select %179, %166, %152 : vector<6x2xi1>, vector<6x2xf32>
    %c7_i32 = arith.constant 7 : i32
    %181 = vector.shape_cast %166 : vector<6x2xf32> to vector<6x1x2xf32>
    %182 = vector.broadcast %181 : vector<6x1x2xf32> to vector<6x6x2xf32>
    %183 = arith.addf %2, %182 : vector<6x6x2xf32>
    %cst_60 = arith.constant dense<0xFF800000> : vector<6x2xf32>
    %184 = vector.multi_reduction <maximumf>, %183, %cst_60 [0] : vector<6x6x2xf32> to vector<6x2xf32>
    %185 = vector.shape_cast %184 : vector<6x2xf32> to vector<1x6x2xf32>
    %186 = vector.broadcast %185 : vector<1x6x2xf32> to vector<6x6x2xf32>
    %187 = arith.cmpf oeq, %183, %186 : vector<6x6x2xf32>
    %c6_i32_61 = arith.constant 6 : i32
    %188 = vector.broadcast %c6_i32_61 : i32 to vector<6x6x2xi32>
    %189 = arith.select %187, %3, %188 : vector<6x6x2xi1>, vector<6x6x2xi32>
    %cst_62 = arith.constant dense<2147483647> : vector<6x2xi32>
    %190 = vector.multi_reduction <minsi>, %189, %cst_62 [0] : vector<6x6x2xi32> to vector<6x2xi32>
    %191 = arith.index_cast %c7_i32 : i32 to index
    %c0_63 = arith.constant 0 : index
    %c0_64 = arith.constant 0 : index
    %192 = vector.load %arg1[%191, %c0_63, %c0_64] : memref<8x6x2xf32, #tpu.memory_space<vmem>>, vector<1x6x2xf32>
    %193 = vector.shape_cast %192 : vector<1x6x2xf32> to vector<6x2xf32>
    %194 = arith.addf %193, %184 : vector<6x2xf32>
    %195 = vector.broadcast %c7_i32 : i32 to vector<1x2xi32>
    %196 = arith.cmpi slt, %195, %5 : vector<1x2xi32>
    %c0_i32_65 = arith.constant 0 : i32
    %197 = vector.shape_cast %196 : vector<1x2xi1> to vector<1x2xi1>
    %198 = vector.broadcast %197 : vector<1x2xi1> to vector<6x2xi1>
    %199 = vector.broadcast %c0_i32_65 : i32 to vector<6x2xi32>
    %200 = arith.select %198, %190, %199 : vector<6x2xi1>, vector<6x2xi32>
    %c1_i32_66 = arith.constant 1 : i32
    %201 = arith.subi %c7_i32, %c1_i32_66 : i32
    %202 = arith.index_cast %201 : i32 to index
    %c0_67 = arith.constant 0 : index
    %c0_68 = arith.constant 0 : index
    %203 = vector.load %arg5[%202, %c0_67, %c0_68] : memref<8x6x2xi32, #tpu.memory_space<vmem>>, vector<1x6x2xi32>
    %204 = vector.shape_cast %203 : vector<1x6x2xi32> to vector<6x2xi32>
    %205 = vector.shape_cast %200 : vector<6x2xi32> to vector<1x6x2xi32>
    tpu.vector_store %arg5[%202, %c0_67, %c0_68], %205 {strides = array<i32>} : memref<8x6x2xi32, #tpu.memory_space<vmem>>, vector<1x6x2xi32>,
    %206 = vector.shape_cast %196 : vector<1x2xi1> to vector<1x2xi1>
    %207 = vector.broadcast %206 : vector<1x2xi1> to vector<6x2xi1>
    %208 = arith.select %207, %194, %180 : vector<6x2xi1>, vector<6x2xf32>
    %c7_i32_69 = arith.constant 7 : i32
    %209 = vector.extract_strided_slice %2 {offsets = [0, 5, 0], sizes = [6, 1, 2], strides = [1, 1, 1]} : vector<6x6x2xf32> to vector<6x1x2xf32>
    %210 = vector.shape_cast %208 : vector<6x2xf32> to vector<6x1x2xf32>
    %211 = arith.addf %209, %210 : vector<6x1x2xf32>
    %cst_70 = arith.constant dense<0xFF800000> : vector<1x2xf32>
    %212 = vector.multi_reduction <maximumf>, %211, %cst_70 [0] : vector<6x1x2xf32> to vector<1x2xf32>
    %213 = vector.shape_cast %212 : vector<1x2xf32> to vector<1x1x2xf32>
    %214 = vector.broadcast %213 : vector<1x1x2xf32> to vector<6x1x2xf32>
    %215 = arith.cmpf oeq, %211, %214 : vector<6x1x2xf32>
    %216 = vector.extract_strided_slice %3 {offsets = [0, 5, 0], sizes = [6, 1, 2], strides = [1, 1, 1]} : vector<6x6x2xi32> to vector<6x1x2xi32>
    %c6_i32_71 = arith.constant 6 : i32
    %217 = vector.broadcast %c6_i32_71 : i32 to vector<6x1x2xi32>
    %218 = arith.select %215, %216, %217 : vector<6x1x2xi1>, vector<6x1x2xi32>
    %cst_72 = arith.constant dense<2147483647> : vector<1x2xi32>
    %219 = vector.multi_reduction <minsi>, %218, %cst_72 [0] : vector<6x1x2xi32> to vector<1x2xi32>
    %c7 = arith.constant 7 : index
    %c0_73 = arith.constant 0 : index
    %c0_74 = arith.constant 0 : index
    %220 = vector.load %arg4[%c7, %c0_73, %c0_74] : memref<8x1x2xi32, #tpu.memory_space<vmem>>, vector<1x1x2xi32>
    %221 = vector.shape_cast %220 : vector<1x1x2xi32> to vector<1x2xi32>
    %222 = vector.shape_cast %219 : vector<1x2xi32> to vector<1x1x2xi32>
    tpu.vector_store %arg4[%c7, %c0_73, %c0_74], %222 {strides = array<i32>} : memref<8x1x2xi32, #tpu.memory_space<vmem>>, vector<1x1x2xi32>,
    %c0_i32_75 = arith.constant 0 : i32
    %c6_i32_76 = arith.constant 6 : i32
    %223 = arith.subi %c6_i32_76, %c0_i32_75 : i32
    %224 = arith.index_cast %223 : i32 to index
    %c0_77 = arith.constant 0 : index
    %c0_78 = arith.constant 0 : index
    %225 = vector.load %arg5[%224, %c0_77, %c0_78] : memref<8x6x2xi32, #tpu.memory_space<vmem>>, vector<1x6x2xi32>
    %226 = vector.shape_cast %225 : vector<1x6x2xi32> to vector<6x2xi32>
    %227 = vector.broadcast %219 : vector<1x2xi32> to vector<6x2xi32>
    %228 = arith.cmpi eq, %4, %227 : vector<6x2xi32>
    %c0_i32_79 = arith.constant 0 : i32
    %229 = vector.broadcast %c0_i32_79 : i32 to vector<6x2xi32>
    %230 = arith.select %228, %226, %229 : vector<6x2xi1>, vector<6x2xi32>
    %cst_80 = arith.constant dense<0> : vector<2xi32>
    %231 = vector.multi_reduction <add>, %230, %cst_80 [0] : vector<6x2xi32> to vector<2xi32>
    %232 = vector.shape_cast %231 : vector<2xi32> to vector<1x2xi32>
    %233 = vector.broadcast %223 : i32 to vector<1x2xi32>
    %234 = arith.cmpi eq, %233, %7 : vector<1x2xi32>
    %235 = arith.select %234, %219, %232 : vector<1x2xi1>, vector<1x2xi32>
    %236 = arith.index_cast %223 : i32 to index
    %c0_81 = arith.constant 0 : index
    %c0_82 = arith.constant 0 : index
    %237 = vector.load %arg4[%236, %c0_81, %c0_82] : memref<8x1x2xi32, #tpu.memory_space<vmem>>, vector<1x1x2xi32>
    %238 = vector.shape_cast %237 : vector<1x1x2xi32> to vector<1x2xi32>
    %239 = vector.shape_cast %235 : vector<1x2xi32> to vector<1x1x2xi32>
    tpu.vector_store %arg4[%236, %c0_81, %c0_82], %239 {strides = array<i32>} : memref<8x1x2xi32, #tpu.memory_space<vmem>>, vector<1x1x2xi32>,
    %c1_i32_83 = arith.constant 1 : i32
    %c6_i32_84 = arith.constant 6 : i32
    %240 = arith.subi %c6_i32_84, %c1_i32_83 : i32
    %241 = arith.index_cast %240 : i32 to index
    %c0_85 = arith.constant 0 : index
    %c0_86 = arith.constant 0 : index
    %242 = vector.load %arg5[%241, %c0_85, %c0_86] : memref<8x6x2xi32, #tpu.memory_space<vmem>>, vector<1x6x2xi32>
    %243 = vector.shape_cast %242 : vector<1x6x2xi32> to vector<6x2xi32>
    %244 = vector.broadcast %235 : vector<1x2xi32> to vector<6x2xi32>
    %245 = arith.cmpi eq, %4, %244 : vector<6x2xi32>
    %c0_i32_87 = arith.constant 0 : i32
    %246 = vector.broadcast %c0_i32_87 : i32 to vector<6x2xi32>
    %247 = arith.select %245, %243, %246 : vector<6x2xi1>, vector<6x2xi32>
    %cst_88 = arith.constant dense<0> : vector<2xi32>
    %248 = vector.multi_reduction <add>, %247, %cst_88 [0] : vector<6x2xi32> to vector<2xi32>
    %249 = vector.shape_cast %248 : vector<2xi32> to vector<1x2xi32>
    %250 = vector.broadcast %240 : i32 to vector<1x2xi32>
    %251 = arith.cmpi eq, %250, %7 : vector<1x2xi32>
    %252 = arith.select %251, %219, %249 : vector<1x2xi1>, vector<1x2xi32>
    %253 = arith.index_cast %240 : i32 to index
    %c0_89 = arith.constant 0 : index
    %c0_90 = arith.constant 0 : index
    %254 = vector.load %arg4[%253, %c0_89, %c0_90] : memref<8x1x2xi32, #tpu.memory_space<vmem>>, vector<1x1x2xi32>
    %255 = vector.shape_cast %254 : vector<1x1x2xi32> to vector<1x2xi32>
    %256 = vector.shape_cast %252 : vector<1x2xi32> to vector<1x1x2xi32>
    tpu.vector_store %arg4[%253, %c0_89, %c0_90], %256 {strides = array<i32>} : memref<8x1x2xi32, #tpu.memory_space<vmem>>, vector<1x1x2xi32>,
    %c2_i32_91 = arith.constant 2 : i32
    %c6_i32_92 = arith.constant 6 : i32
    %257 = arith.subi %c6_i32_92, %c2_i32_91 : i32
    %258 = arith.index_cast %257 : i32 to index
    %c0_93 = arith.constant 0 : index
    %c0_94 = arith.constant 0 : index
    %259 = vector.load %arg5[%258, %c0_93, %c0_94] : memref<8x6x2xi32, #tpu.memory_space<vmem>>, vector<1x6x2xi32>
    %260 = vector.shape_cast %259 : vector<1x6x2xi32> to vector<6x2xi32>
    %261 = vector.broadcast %252 : vector<1x2xi32> to vector<6x2xi32>
    %262 = arith.cmpi eq, %4, %261 : vector<6x2xi32>
    %c0_i32_95 = arith.constant 0 : i32
    %263 = vector.broadcast %c0_i32_95 : i32 to vector<6x2xi32>
    %264 = arith.select %262, %260, %263 : vector<6x2xi1>, vector<6x2xi32>
    %cst_96 = arith.constant dense<0> : vector<2xi32>
    %265 = vector.multi_reduction <add>, %264, %cst_96 [0] : vector<6x2xi32> to vector<2xi32>
    %266 = vector.shape_cast %265 : vector<2xi32> to vector<1x2xi32>
    %267 = vector.broadcast %257 : i32 to vector<1x2xi32>
    %268 = arith.cmpi eq, %267, %7 : vector<1x2xi32>
    %269 = arith.select %268, %219, %266 : vector<1x2xi1>, vector<1x2xi32>
    %270 = arith.index_cast %257 : i32 to index
    %c0_97 = arith.constant 0 : index
    %c0_98 = arith.constant 0 : index
    %271 = vector.load %arg4[%270, %c0_97, %c0_98] : memref<8x1x2xi32, #tpu.memory_space<vmem>>, vector<1x1x2xi32>
    %272 = vector.shape_cast %271 : vector<1x1x2xi32> to vector<1x2xi32>
    %273 = vector.shape_cast %269 : vector<1x2xi32> to vector<1x1x2xi32>
    tpu.vector_store %arg4[%270, %c0_97, %c0_98], %273 {strides = array<i32>} : memref<8x1x2xi32, #tpu.memory_space<vmem>>, vector<1x1x2xi32>,
    %c3_i32_99 = arith.constant 3 : i32
    %c6_i32_100 = arith.constant 6 : i32
    %274 = arith.subi %c6_i32_100, %c3_i32_99 : i32
    %275 = arith.index_cast %274 : i32 to index
    %c0_101 = arith.constant 0 : index
    %c0_102 = arith.constant 0 : index
    %276 = vector.load %arg5[%275, %c0_101, %c0_102] : memref<8x6x2xi32, #tpu.memory_space<vmem>>, vector<1x6x2xi32>
    %277 = vector.shape_cast %276 : vector<1x6x2xi32> to vector<6x2xi32>
    %278 = vector.broadcast %269 : vector<1x2xi32> to vector<6x2xi32>
    %279 = arith.cmpi eq, %4, %278 : vector<6x2xi32>
    %c0_i32_103 = arith.constant 0 : i32
    %280 = vector.broadcast %c0_i32_103 : i32 to vector<6x2xi32>
    %281 = arith.select %279, %277, %280 : vector<6x2xi1>, vector<6x2xi32>
    %cst_104 = arith.constant dense<0> : vector<2xi32>
    %282 = vector.multi_reduction <add>, %281, %cst_104 [0] : vector<6x2xi32> to vector<2xi32>
    %283 = vector.shape_cast %282 : vector<2xi32> to vector<1x2xi32>
    %284 = vector.broadcast %274 : i32 to vector<1x2xi32>
    %285 = arith.cmpi eq, %284, %7 : vector<1x2xi32>
    %286 = arith.select %285, %219, %283 : vector<1x2xi1>, vector<1x2xi32>
    %287 = arith.index_cast %274 : i32 to index
    %c0_105 = arith.constant 0 : index
    %c0_106 = arith.constant 0 : index
    %288 = vector.load %arg4[%287, %c0_105, %c0_106] : memref<8x1x2xi32, #tpu.memory_space<vmem>>, vector<1x1x2xi32>
    %289 = vector.shape_cast %288 : vector<1x1x2xi32> to vector<1x2xi32>
    %290 = vector.shape_cast %286 : vector<1x2xi32> to vector<1x1x2xi32>
    tpu.vector_store %arg4[%287, %c0_105, %c0_106], %290 {strides = array<i32>} : memref<8x1x2xi32, #tpu.memory_space<vmem>>, vector<1x1x2xi32>,
    %c4_i32_107 = arith.constant 4 : i32
    %c6_i32_108 = arith.constant 6 : i32
    %291 = arith.subi %c6_i32_108, %c4_i32_107 : i32
    %292 = arith.index_cast %291 : i32 to index
    %c0_109 = arith.constant 0 : index
    %c0_110 = arith.constant 0 : index
    %293 = vector.load %arg5[%292, %c0_109, %c0_110] : memref<8x6x2xi32, #tpu.memory_space<vmem>>, vector<1x6x2xi32>
    %294 = vector.shape_cast %293 : vector<1x6x2xi32> to vector<6x2xi32>
    %295 = vector.broadcast %286 : vector<1x2xi32> to vector<6x2xi32>
    %296 = arith.cmpi eq, %4, %295 : vector<6x2xi32>
    %c0_i32_111 = arith.constant 0 : i32
    %297 = vector.broadcast %c0_i32_111 : i32 to vector<6x2xi32>
    %298 = arith.select %296, %294, %297 : vector<6x2xi1>, vector<6x2xi32>
    %cst_112 = arith.constant dense<0> : vector<2xi32>
    %299 = vector.multi_reduction <add>, %298, %cst_112 [0] : vector<6x2xi32> to vector<2xi32>
    %300 = vector.shape_cast %299 : vector<2xi32> to vector<1x2xi32>
    %301 = vector.broadcast %291 : i32 to vector<1x2xi32>
    %302 = arith.cmpi eq, %301, %7 : vector<1x2xi32>
    %303 = arith.select %302, %219, %300 : vector<1x2xi1>, vector<1x2xi32>
    %304 = arith.index_cast %291 : i32 to index
    %c0_113 = arith.constant 0 : index
    %c0_114 = arith.constant 0 : index
    %305 = vector.load %arg4[%304, %c0_113, %c0_114] : memref<8x1x2xi32, #tpu.memory_space<vmem>>, vector<1x1x2xi32>
    %306 = vector.shape_cast %305 : vector<1x1x2xi32> to vector<1x2xi32>
    %307 = vector.shape_cast %303 : vector<1x2xi32> to vector<1x1x2xi32>
    tpu.vector_store %arg4[%304, %c0_113, %c0_114], %307 {strides = array<i32>} : memref<8x1x2xi32, #tpu.memory_space<vmem>>, vector<1x1x2xi32>,
    %c5_i32_115 = arith.constant 5 : i32
    %c6_i32_116 = arith.constant 6 : i32
    %308 = arith.subi %c6_i32_116, %c5_i32_115 : i32
    %309 = arith.index_cast %308 : i32 to index
    %c0_117 = arith.constant 0 : index
    %c0_118 = arith.constant 0 : index
    %310 = vector.load %arg5[%309, %c0_117, %c0_118] : memref<8x6x2xi32, #tpu.memory_space<vmem>>, vector<1x6x2xi32>
    %311 = vector.shape_cast %310 : vector<1x6x2xi32> to vector<6x2xi32>
    %312 = vector.broadcast %303 : vector<1x2xi32> to vector<6x2xi32>
    %313 = arith.cmpi eq, %4, %312 : vector<6x2xi32>
    %c0_i32_119 = arith.constant 0 : i32
    %314 = vector.broadcast %c0_i32_119 : i32 to vector<6x2xi32>
    %315 = arith.select %313, %311, %314 : vector<6x2xi1>, vector<6x2xi32>
    %cst_120 = arith.constant dense<0> : vector<2xi32>
    %316 = vector.multi_reduction <add>, %315, %cst_120 [0] : vector<6x2xi32> to vector<2xi32>
    %317 = vector.shape_cast %316 : vector<2xi32> to vector<1x2xi32>
    %318 = vector.broadcast %308 : i32 to vector<1x2xi32>
    %319 = arith.cmpi eq, %318, %7 : vector<1x2xi32>
    %320 = arith.select %319, %219, %317 : vector<1x2xi1>, vector<1x2xi32>
    %321 = arith.index_cast %308 : i32 to index
    %c0_121 = arith.constant 0 : index
    %c0_122 = arith.constant 0 : index
    %322 = vector.load %arg4[%321, %c0_121, %c0_122] : memref<8x1x2xi32, #tpu.memory_space<vmem>>, vector<1x1x2xi32>
    %323 = vector.shape_cast %322 : vector<1x1x2xi32> to vector<1x2xi32>
    %324 = vector.shape_cast %320 : vector<1x2xi32> to vector<1x1x2xi32>
    tpu.vector_store %arg4[%321, %c0_121, %c0_122], %324 {strides = array<i32>} : memref<8x1x2xi32, #tpu.memory_space<vmem>>, vector<1x1x2xi32>,
    %c6_i32_123 = arith.constant 6 : i32
    %c6_i32_124 = arith.constant 6 : i32
    %325 = arith.subi %c6_i32_124, %c6_i32_123 : i32
    %326 = arith.index_cast %325 : i32 to index
    %c0_125 = arith.constant 0 : index
    %c0_126 = arith.constant 0 : index
    %327 = vector.load %arg5[%326, %c0_125, %c0_126] : memref<8x6x2xi32, #tpu.memory_space<vmem>>, vector<1x6x2xi32>
    %328 = vector.shape_cast %327 : vector<1x6x2xi32> to vector<6x2xi32>
    %329 = vector.broadcast %320 : vector<1x2xi32> to vector<6x2xi32>
    %330 = arith.cmpi eq, %4, %329 : vector<6x2xi32>
    %c0_i32_127 = arith.constant 0 : i32
    %331 = vector.broadcast %c0_i32_127 : i32 to vector<6x2xi32>
    %332 = arith.select %330, %328, %331 : vector<6x2xi1>, vector<6x2xi32>
    %cst_128 = arith.constant dense<0> : vector<2xi32>
    %333 = vector.multi_reduction <add>, %332, %cst_128 [0] : vector<6x2xi32> to vector<2xi32>
    %334 = vector.shape_cast %333 : vector<2xi32> to vector<1x2xi32>
    %335 = vector.broadcast %325 : i32 to vector<1x2xi32>
    %336 = arith.cmpi eq, %335, %7 : vector<1x2xi32>
    %337 = arith.select %336, %219, %334 : vector<1x2xi1>, vector<1x2xi32>
    %338 = arith.index_cast %325 : i32 to index
    %c0_129 = arith.constant 0 : index
    %c0_130 = arith.constant 0 : index
    %339 = vector.load %arg4[%338, %c0_129, %c0_130] : memref<8x1x2xi32, #tpu.memory_space<vmem>>, vector<1x1x2xi32>
    %340 = vector.shape_cast %339 : vector<1x1x2xi32> to vector<1x2xi32>
    %341 = vector.shape_cast %337 : vector<1x2xi32> to vector<1x1x2xi32>
    tpu.vector_store %arg4[%338, %c0_129, %c0_130], %341 {strides = array<i32>} : memref<8x1x2xi32, #tpu.memory_space<vmem>>, vector<1x1x2xi32>,
    %c7_i32_131 = arith.constant 7 : i32
    return
  }
  func.func @transform_0(%arg0: i32) -> (i32, i32, i32) {
    %c0_i32 = arith.constant 0 : i32
    %c0_i32_0 = arith.constant 0 : i32
    %c0_i32_1 = arith.constant 0 : i32
    return %c0_i32, %c0_i32_0, %arg0 : i32, i32, i32
  }
  func.func @transform_1(%arg0: i32) -> (i32, i32) {
    %c0_i32 = arith.constant 0 : i32
    %c0_i32_0 = arith.constant 0 : i32
    return %c0_i32, %arg0 : i32, i32
  }
  func.func @transform_2(%arg0: i32) -> (i32, i32, i32) {
    %c0_i32 = arith.constant 0 : i32
    %c0_i32_0 = arith.constant 0 : i32
    %c0_i32_1 = arith.constant 0 : i32
    %c0_i32_2 = arith.constant 0 : i32
    return %c0_i32, %c0_i32_0, %c0_i32_1 : i32, i32, i32
  }
  func.func @transform_3(%arg0: i32) -> (i32, i32, i32) {
    %c0_i32 = arith.constant 0 : i32
    %c0_i32_0 = arith.constant 0 : i32
    %c0_i32_1 = arith.constant 0 : i32
    return %c0_i32, %c0_i32_0, %arg0 : i32, i32, i32
  }
}

</mosaic_0001>

<llo_original>
// kernel: tpu_custom_call.1
$region0: #{tpu_custom_call.1}
  #allocation0 [shape = 'u32[]', space=smem, size = 0x4, offset = 0x4, fixed_abs, tag = 'smem constant byte address 0x4 - core index']
  #allocation1 [shape = 'u32[72,128]{1,0:T(1,128)}', space=vmem, size = 0x9000, scoped, tag = 'internal scratch']
  #allocation2 [shape = 's32[8,6,2]{2,1,0:T(8,128)}', space=vmem, size = 0x8000, scoped, tag = 'scratch operand']
  %s0 = inlined_call_operand.vmem [shape: f32[8,6,2], index: 0, kind: input, shape index: {}]
  %s1 = inlined_call_operand.vmem [shape: s32[1,2], index: 1, kind: input, shape index: {}]
  %s2 = inlined_call_operand.vmem [shape: f32[6,6,1], index: 2, kind: input, shape index: {}]
  %s3 = inlined_call_operand.vmem [shape: s32[8,1,2], index: 3, kind: output, shape index: {}]
  %s4 = sld [smem:[#allocation0]]
  $region22: #{tpu_custom_call.1} parent=0
    _
  %s6 = ssub.s32 1, %s4
  %s7 = scalar_select 0, %s6, %s4
  // Predicated region
  $region2: #{tpu_custom_call.1} parent=0 // pred_check
    _
  $region3: #{tpu_custom_call.1} parent=0 // pred_check_branch
    %9 = sbr.rel (0) target = $region5
  $region4: #{tpu_custom_call.1} parent=0 // pred_region
    _
  $region5: #{tpu_custom_call.1} parent=0 // pred_fallthru
    _
  // Predicated region
  $region6: #{tpu_custom_call.1} parent=0 // pred_check
    _
  $region7: #{tpu_custom_call.1} parent=0 // pred_check_branch
    %11 = sbr.rel (0) target = $region9
  $region8: #{tpu_custom_call.1} parent=0 // pred_region
    _
  $region9: #{tpu_custom_call.1} parent=0 // pred_fallthru
    _
  // Predicated region
  $region10: #{tpu_custom_call.1} parent=0 // pred_check
    _
  $region11: #{tpu_custom_call.1} parent=0 // pred_check_branch
    %13 = sbr.rel (0) target = $region13
  $region12: #{tpu_custom_call.1} parent=0 // pred_region
    _
  $region13: #{tpu_custom_call.1} parent=0 // pred_fallthru
    _
  %v14 = vld [vmem:[%s2] sm:$0x3f]
  %v15 = vld [vmem:[%s2 + $0x8] sm:$0x3f]
  %v16 = vld [vmem:[%s2 + $0x10] sm:$0x3f]
  %v17 = vld [vmem:[%s2 + $0x18] sm:$0x3f]
  %v18 = vld [vmem:[%s2 + $0x20] sm:$0x3f]
  %v19 = vld [vmem:[%s2 + $0x28] sm:$0x3f]
  %21 = vset.pattern.permute.xlu0 0
  %22 = vperm.xlu0 %21, %v14
  %v23 = vpop.permute.xlu0 %22
  %26 = vset.pattern.permute.xlu0 0
  %27 = vperm.xlu0 %26, %v15
  %v28 = vpop.permute.xlu0 %27
  %31 = vset.pattern.permute.xlu0 0
  %32 = vperm.xlu0 %31, %v16
  %v33 = vpop.permute.xlu0 %32
  %36 = vset.pattern.permute.xlu0 0
  %37 = vperm.xlu0 %36, %v17
  %v38 = vpop.permute.xlu0 %37
  %41 = vset.pattern.permute.xlu0 0
  %42 = vperm.xlu0 %41, %v18
  %v43 = vpop.permute.xlu0 %42
  %46 = vset.pattern.permute.xlu0 0
  %47 = vperm.xlu0 %46, %v19
  %v48 = vpop.permute.xlu0 %47
  %v50 = vlaneseq
  %v51 = vshrl.u32 %v50, 7
  %v52 = vld [vmem:[%s1] sm:$0x1]
  %v53 = vsub.s32 %v52, 1
  %v54 = vld [vmem:[%s0] sm:$0x3f]
  %v55 = vadd.f32 %v54, %v43
  %v57 = vrot.slane %v55, 1
  %v58 = vrot.slane %v55, 2
  %v59 = vrot.slane %v55, 3
  %v60 = vrot.slane %v55, 4
  %v61 = vrot.slane %v55, 5
  %v62 = vperm.slane %v55, 0
  %v63 = vperm.slane %v57, 0
  %v64 = vperm.slane %v58, 0
  %v65 = vperm.slane %v59, 0
  %v66 = vperm.slane %v60, 0
  %v67 = vperm.slane %v61, 0
  %v74 = vadd.f32 %v23, %v62
  %v75 = vadd.f32 %v28, %v63
  %v76 = vadd.f32 %v33, %v64
  %v77 = vadd.f32 %v38, %v65
  %v78 = vadd.f32 %v43, %v66
  %v79 = vadd.f32 %v48, %v67
  %vm80 = vcmask 13312
  %v81 = vsel %vm80, %v74, -inf
  %v82 = vsel %vm80, %v75, -inf
  %v83 = vsel %vm80, %v76, -inf
  %v84 = vsel %vm80, %v77, -inf
  %v85 = vsel %vm80, %v78, -inf
  %v86 = vmax.f32 %v81, %v85
  %v87 = vsel %vm80, %v79, -inf
  %v88 = vmax.f32 %v82, %v87
  %v89 = vmax.f32 %v86, %v88
  %v90 = vmax.f32 %v83, %v84
  %v91 = vmax.f32 %v89, %v90
  %vm92 = vcmp.eq.f32.partialorder %v74, %v91
  %vm93 = vcmp.eq.f32.partialorder %v75, %v91
  %vm94 = vcmp.eq.f32.partialorder %v76, %v91
  %vm95 = vcmp.eq.f32.partialorder %v77, %v91
  %vm96 = vcmp.eq.f32.partialorder %v78, %v91
  %vm97 = vcmp.eq.f32.partialorder %v79, %v91
  %v98 = vsel %vm92, 0, 6
  %v99 = vsel %vm93, 1, 6
  %v100 = vsel %vm94, 2, 6
  %v101 = vsel %vm95, 3, 6
  %v102 = vsel %vm96, 4, 6
  %v103 = vsel %vm97, 5, 6
  %v104 = vsel %vm80, %v98, 2147483647
  %v105 = vsel %vm80, %v99, 2147483647
  %v106 = vsel %vm80, %v100, 2147483647
  %v107 = vsel %vm80, %v101, 2147483647
  %v108 = vsel %vm80, %v102, 2147483647
  %vm109 = vcmp.lt.s32.totalorder %v104, %v108
  %v110 = vsel %vm109, %v104, %v108
  %v111 = vsel %vm80, %v103, 2147483647
  %vm112 = vcmp.lt.s32.totalorder %v105, %v111
  %v113 = vsel %vm112, %v105, %v111
  %vm114 = vcmp.lt.s32.totalorder %v110, %v113
  %v115 = vsel %vm114, %v110, %v113
  %vm116 = vcmp.lt.s32.totalorder %v106, %v107
  %v117 = vsel %vm116, %v106, %v107
  %vm118 = vcmp.lt.s32.totalorder %v115, %v117
  %v119 = vsel %vm118, %v115, %v117
  %s120 = scalar_lea.vmem %s0, 8
  %v121 = vld [vmem:[%s120] sm:$0x3f]
  %v122 = vadd.f32 %v121, %v91
  %vm123 = vcmp.gt.s32.totalorder %v52, 1
  %v124 = vsel %vm123, 1, 0
  %v125 = vperm.slane %v124, 0
  %vm126 = vcmp.eq.s32.totalorder %v125, 1
  %v127 = vsel %vm126, %v119, 0
  %128 = vst.msk [vmem:[#allocation2] sm:$0x3f] %vm80, %v127
  %v129 = vsel %vm126, %v122, %v55
  %v131 = vrot.slane %v122, 1
  %v132 = vrot.slane %v122, 2
  %v133 = vrot.slane %v122, 3
  %v134 = vrot.slane %v122, 4
  %v135 = vrot.slane %v122, 5
  %v136 = vperm.slane %v122, 0
  %v137 = vperm.slane %v131, 0
  %v138 = vperm.slane %v132, 0
  %v139 = vperm.slane %v133, 0
  %v140 = vperm.slane %v134, 0
  %v141 = vperm.slane %v135, 0
  %v148 = vadd.f32 %v23, %v136
  %v149 = vadd.f32 %v28, %v137
  %v150 = vadd.f32 %v33, %v138
  %v151 = vadd.f32 %v38, %v139
  %v152 = vadd.f32 %v43, %v140
  %v153 = vadd.f32 %v48, %v141
  %v154 = vsel %vm80, %v148, -inf
  %v155 = vsel %vm80, %v149, -inf
  %v156 = vsel %vm80, %v150, -inf
  %v157 = vsel %vm80, %v151, -inf
  %v158 = vsel %vm80, %v152, -inf
  %v159 = vmax.f32 %v154, %v158
  %v160 = vsel %vm80, %v153, -inf
  %v161 = vmax.f32 %v155, %v160
  %v162 = vmax.f32 %v159, %v161
  %v163 = vmax.f32 %v156, %v157
  %v164 = vmax.f32 %v162, %v163
  %vm165 = vcmp.eq.f32.partialorder %v148, %v164
  %vm166 = vcmp.eq.f32.partialorder %v149, %v164
  %vm167 = vcmp.eq.f32.partialorder %v150, %v164
  %vm168 = vcmp.eq.f32.partialorder %v151, %v164
  %vm169 = vcmp.eq.f32.partialorder %v152, %v164
  %vm170 = vcmp.eq.f32.partialorder %v153, %v164
  %v171 = vsel %vm165, 0, 6
  %v172 = vsel %vm166, 1, 6
  %v173 = vsel %vm167, 2, 6
  %v174 = vsel %vm168, 3, 6
  %v175 = vsel %vm169, 4, 6
  %v176 = vsel %vm170, 5, 6
  %v177 = vsel %vm80, %v171, 2147483647
  %v178 = vsel %vm80, %v172, 2147483647
  %v179 = vsel %vm80, %v173, 2147483647
  %v180 = vsel %vm80, %v174, 2147483647
  %v181 = vsel %vm80, %v175, 2147483647
  %vm182 = vcmp.lt.s32.totalorder %v177, %v181
  %v183 = vsel %vm182, %v177, %v181
  %v184 = vsel %vm80, %v176, 2147483647
  %vm185 = vcmp.lt.s32.totalorder %v178, %v184
  %v186 = vsel %vm185, %v178, %v184
  %vm187 = vcmp.lt.s32.totalorder %v183, %v186
  %v188 = vsel %vm187, %v183, %v186
  %vm189 = vcmp.lt.s32.totalorder %v179, %v180
  %v190 = vsel %vm189, %v179, %v180
  %vm191 = vcmp.lt.s32.totalorder %v188, %v190
  %v192 = vsel %vm191, %v188, %v190
  %s193 = scalar_lea.vmem %s0, 16
  %v194 = vld [vmem:[%s193] sm:$0x3f]
  %v195 = vadd.f32 %v194, %v164
  %vm196 = vcmp.gt.s32.totalorder %v52, 2
  %v197 = vsel %vm196, 1, 0
  %v198 = vperm.slane %v197, 0
  %vm199 = vcmp.eq.s32.totalorder %v198, 1
  %v200 = vsel %vm199, %v192, 0
  %s201 = scalar_lea.vmem [#allocation2], 8
  %202 = vst.msk [vmem:[%s201] sm:$0x3f] %vm80, %v200
  %v203 = vsel %vm199, %v195, %v129
  %v205 = vrot.slane %v195, 1
  %v206 = vrot.slane %v195, 2
  %v207 = vrot.slane %v195, 3
  %v208 = vrot.slane %v195, 4
  %v209 = vrot.slane %v195, 5
  %v210 = vperm.slane %v195, 0
  %v211 = vperm.slane %v205, 0
  %v212 = vperm.slane %v206, 0
  %v213 = vperm.slane %v207, 0
  %v214 = vperm.slane %v208, 0
  %v215 = vperm.slane %v209, 0
  %v222 = vadd.f32 %v23, %v210
  %v223 = vadd.f32 %v28, %v211
  %v224 = vadd.f32 %v33, %v212
  %v225 = vadd.f32 %v38, %v213
  %v226 = vadd.f32 %v43, %v214
  %v227 = vadd.f32 %v48, %v215
  %v228 = vsel %vm80, %v222, -inf
  %v229 = vsel %vm80, %v223, -inf
  %v230 = vsel %vm80, %v224, -inf
  %v231 = vsel %vm80, %v225, -inf
  %v232 = vsel %vm80, %v226, -inf
  %v233 = vmax.f32 %v228, %v232
  %v234 = vsel %vm80, %v227, -inf
  %v235 = vmax.f32 %v229, %v234
  %v236 = vmax.f32 %v233, %v235
  %v237 = vmax.f32 %v230, %v231
  %v238 = vmax.f32 %v236, %v237
  %vm239 = vcmp.eq.f32.partialorder %v222, %v238
  %vm240 = vcmp.eq.f32.partialorder %v223, %v238
  %vm241 = vcmp.eq.f32.partialorder %v224, %v238
  %vm242 = vcmp.eq.f32.partialorder %v225, %v238
  %vm243 = vcmp.eq.f32.partialorder %v226, %v238
  %vm244 = vcmp.eq.f32.partialorder %v227, %v238
  %v245 = vsel %vm239, 0, 6
  %v246 = vsel %vm240, 1, 6
  %v247 = vsel %vm241, 2, 6
  %v248 = vsel %vm242, 3, 6
  %v249 = vsel %vm243, 4, 6
  %v250 = vsel %vm244, 5, 6
  %v251 = vsel %vm80, %v245, 2147483647
  %v252 = vsel %vm80, %v246, 2147483647
  %v253 = vsel %vm80, %v247, 2147483647
  %v254 = vsel %vm80, %v248, 2147483647
  %v255 = vsel %vm80, %v249, 2147483647
  %vm256 = vcmp.lt.s32.totalorder %v251, %v255
  %v257 = vsel %vm256, %v251, %v255
  %v258 = vsel %vm80, %v250, 2147483647
  %vm259 = vcmp.lt.s32.totalorder %v252, %v258
  %v260 = vsel %vm259, %v252, %v258
  %vm261 = vcmp.lt.s32.totalorder %v257, %v260
  %v262 = vsel %vm261, %v257, %v260
  %vm263 = vcmp.lt.s32.totalorder %v253, %v254
  %v264 = vsel %vm263, %v253, %v254
  %vm265 = vcmp.lt.s32.totalorder %v262, %v264
  %v266 = vsel %vm265, %v262, %v264
  %s267 = scalar_lea.vmem %s0, 24
  %v268 = vld [vmem:[%s267] sm:$0x3f]
  %v269 = vadd.f32 %v268, %v238
  %vm270 = vcmp.gt.s32.totalorder %v52, 3
  %v271 = vsel %vm270, 1, 0
  %v272 = vperm.slane %v271, 0
  %vm273 = vcmp.eq.s32.totalorder %v272, 1
  %v274 = vsel %vm273, %v266, 0
  %s275 = scalar_lea.vmem [#allocation2], 16
  %276 = vst.msk [vmem:[%s275] sm:$0x3f] %vm80, %v274
  %v277 = vsel %vm273, %v269, %v203
  %v279 = vrot.slane %v269, 1
  %v280 = vrot.slane %v269, 2
  %v281 = vrot.slane %v269, 3
  %v282 = vrot.slane %v269, 4
  %v283 = vrot.slane %v269, 5
  %v284 = vperm.slane %v269, 0
  %v285 = vperm.slane %v279, 0
  %v286 = vperm.slane %v280, 0
  %v287 = vperm.slane %v281, 0
  %v288 = vperm.slane %v282, 0
  %v289 = vperm.slane %v283, 0
  %v296 = vadd.f32 %v23, %v284
  %v297 = vadd.f32 %v28, %v285
  %v298 = vadd.f32 %v33, %v286
  %v299 = vadd.f32 %v38, %v287
  %v300 = vadd.f32 %v43, %v288
  %v301 = vadd.f32 %v48, %v289
  %v302 = vsel %vm80, %v296, -inf
  %v303 = vsel %vm80, %v297, -inf
  %v304 = vsel %vm80, %v298, -inf
  %v305 = vsel %vm80, %v299, -inf
  %v306 = vsel %vm80, %v300, -inf
  %v307 = vmax.f32 %v302, %v306
  %v308 = vsel %vm80, %v301, -inf
  %v309 = vmax.f32 %v303, %v308
  %v310 = vmax.f32 %v307, %v309
  %v311 = vmax.f32 %v304, %v305
  %v312 = vmax.f32 %v310, %v311
  %vm313 = vcmp.eq.f32.partialorder %v296, %v312
  %vm314 = vcmp.eq.f32.partialorder %v297, %v312
  %vm315 = vcmp.eq.f32.partialorder %v298, %v312
  %vm316 = vcmp.eq.f32.partialorder %v299, %v312
  %vm317 = vcmp.eq.f32.partialorder %v300, %v312
  %vm318 = vcmp.eq.f32.partialorder %v301, %v312
  %v319 = vsel %vm313, 0, 6
  %v320 = vsel %vm314, 1, 6
  %v321 = vsel %vm315, 2, 6
  %v322 = vsel %vm316, 3, 6
  %v323 = vsel %vm317, 4, 6
  %v324 = vsel %vm318, 5, 6
  %v325 = vsel %vm80, %v319, 2147483647
  %v326 = vsel %vm80, %v320, 2147483647
  %v327 = vsel %vm80, %v321, 2147483647
  %v328 = vsel %vm80, %v322, 2147483647
  %v329 = vsel %vm80, %v323, 2147483647
  %vm330 = vcmp.lt.s32.totalorder %v325, %v329
  %v331 = vsel %vm330, %v325, %v329
  %v332 = vsel %vm80, %v324, 2147483647
  %vm333 = vcmp.lt.s32.totalorder %v326, %v332
  %v334 = vsel %vm333, %v326, %v332
  %vm335 = vcmp.lt.s32.totalorder %v331, %v334
  %v336 = vsel %vm335, %v331, %v334
  %vm337 = vcmp.lt.s32.totalorder %v327, %v328
  %v338 = vsel %vm337, %v327, %v328
  %vm339 = vcmp.lt.s32.totalorder %v336, %v338
  %v340 = vsel %vm339, %v336, %v338
  %s341 = scalar_lea.vmem %s0, 32
  %v342 = vld [vmem:[%s341] sm:$0x3f]
  %v343 = vadd.f32 %v342, %v312
  %vm344 = vcmp.gt.s32.totalorder %v52, 4
  %v345 = vsel %vm344, 1, 0
  %v346 = vperm.slane %v345, 0
  %vm347 = vcmp.eq.s32.totalorder %v346, 1
  %v348 = vsel %vm347, %v340, 0
  %s349 = scalar_lea.vmem [#allocation2], 24
  %350 = vst.msk [vmem:[%s349] sm:$0x3f] %vm80, %v348
  %v351 = vsel %vm347, %v343, %v277
  %v353 = vrot.slane %v343, 1
  %v354 = vrot.slane %v343, 2
  %v355 = vrot.slane %v343, 3
  %v356 = vrot.slane %v343, 4
  %v357 = vrot.slane %v343, 5
  %v358 = vperm.slane %v343, 0
  %v359 = vperm.slane %v353, 0
  %v360 = vperm.slane %v354, 0
  %v361 = vperm.slane %v355, 0
  %v362 = vperm.slane %v356, 0
  %v363 = vperm.slane %v357, 0
  %v370 = vadd.f32 %v23, %v358
  %v371 = vadd.f32 %v28, %v359
  %v372 = vadd.f32 %v33, %v360
  %v373 = vadd.f32 %v38, %v361
  %v374 = vadd.f32 %v43, %v362
  %v375 = vadd.f32 %v48, %v363
  %v376 = vsel %vm80, %v370, -inf
  %v377 = vsel %vm80, %v371, -inf
  %v378 = vsel %vm80, %v372, -inf
  %v379 = vsel %vm80, %v373, -inf
  %v380 = vsel %vm80, %v374, -inf
  %v381 = vmax.f32 %v376, %v380
  %v382 = vsel %vm80, %v375, -inf
  %v383 = vmax.f32 %v377, %v382
  %v384 = vmax.f32 %v381, %v383
  %v385 = vmax.f32 %v378, %v379
  %v386 = vmax.f32 %v384, %v385
  %vm387 = vcmp.eq.f32.partialorder %v370, %v386
  %vm388 = vcmp.eq.f32.partialorder %v371, %v386
  %vm389 = vcmp.eq.f32.partialorder %v372, %v386
  %vm390 = vcmp.eq.f32.partialorder %v373, %v386
  %vm391 = vcmp.eq.f32.partialorder %v374, %v386
  %vm392 = vcmp.eq.f32.partialorder %v375, %v386
  %v393 = vsel %vm387, 0, 6
  %v394 = vsel %vm388, 1, 6
  %v395 = vsel %vm389, 2, 6
  %v396 = vsel %vm390, 3, 6
  %v397 = vsel %vm391, 4, 6
  %v398 = vsel %vm392, 5, 6
  %v399 = vsel %vm80, %v393, 2147483647
  %v400 = vsel %vm80, %v394, 2147483647
  %v401 = vsel %vm80, %v395, 2147483647
  %v402 = vsel %vm80, %v396, 2147483647
  %v403 = vsel %vm80, %v397, 2147483647
  %vm404 = vcmp.lt.s32.totalorder %v399, %v403
  %v405 = vsel %vm404, %v399, %v403
  %v406 = vsel %vm80, %v398, 2147483647
  %vm407 = vcmp.lt.s32.totalorder %v400, %v406
  %v408 = vsel %vm407, %v400, %v406
  %vm409 = vcmp.lt.s32.totalorder %v405, %v408
  %v410 = vsel %vm409, %v405, %v408
  %vm411 = vcmp.lt.s32.totalorder %v401, %v402
  %v412 = vsel %vm411, %v401, %v402
  %vm413 = vcmp.lt.s32.totalorder %v410, %v412
  %v414 = vsel %vm413, %v410, %v412
  %s415 = scalar_lea.vmem %s0, 40
  %v416 = vld [vmem:[%s415] sm:$0x3f]
  %v417 = vadd.f32 %v416, %v386
  %vm418 = vcmp.gt.s32.totalorder %v52, 5
  %v419 = vsel %vm418, 1, 0
  %v420 = vperm.slane %v419, 0
  %vm421 = vcmp.eq.s32.totalorder %v420, 1
  %v422 = vsel %vm421, %v414, 0
  %s423 = scalar_lea.vmem [#allocation2], 32
  %424 = vst.msk [vmem:[%s423] sm:$0x3f] %vm80, %v422
  %v425 = vsel %vm421, %v417, %v351
  %v427 = vrot.slane %v417, 1
  %v428 = vrot.slane %v417, 2
  %v429 = vrot.slane %v417, 3
  %v430 = vrot.slane %v417, 4
  %v431 = vrot.slane %v417, 5
  %v432 = vperm.slane %v417, 0
  %v433 = vperm.slane %v427, 0
  %v434 = vperm.slane %v428, 0
  %v435 = vperm.slane %v429, 0
  %v436 = vperm.slane %v430, 0
  %v437 = vperm.slane %v431, 0
  %v444 = vadd.f32 %v23, %v432
  %v445 = vadd.f32 %v28, %v433
  %v446 = vadd.f32 %v33, %v434
  %v447 = vadd.f32 %v38, %v435
  %v448 = vadd.f32 %v43, %v436
  %v449 = vadd.f32 %v48, %v437
  %v450 = vsel %vm80, %v444, -inf
  %v451 = vsel %vm80, %v445, -inf
  %v452 = vsel %vm80, %v446, -inf
  %v453 = vsel %vm80, %v447, -inf
  %v454 = vsel %vm80, %v448, -inf
  %v455 = vmax.f32 %v450, %v454
  %v456 = vsel %vm80, %v449, -inf
  %v457 = vmax.f32 %v451, %v456
  %v458 = vmax.f32 %v455, %v457
  %v459 = vmax.f32 %v452, %v453
  %v460 = vmax.f32 %v458, %v459
  %vm461 = vcmp.eq.f32.partialorder %v444, %v460
  %vm462 = vcmp.eq.f32.partialorder %v445, %v460
  %vm463 = vcmp.eq.f32.partialorder %v446, %v460
  %vm464 = vcmp.eq.f32.partialorder %v447, %v460
  %vm465 = vcmp.eq.f32.partialorder %v448, %v460
  %vm466 = vcmp.eq.f32.partialorder %v449, %v460
  %v467 = vsel %vm461, 0, 6
  %v468 = vsel %vm462, 1, 6
  %v469 = vsel %vm463, 2, 6
  %v470 = vsel %vm464, 3, 6
  %v471 = vsel %vm465, 4, 6
  %v472 = vsel %vm466, 5, 6
  %v473 = vsel %vm80, %v467, 2147483647
  %v474 = vsel %vm80, %v468, 2147483647
  %v475 = vsel %vm80, %v469, 2147483647
  %v476 = vsel %vm80, %v470, 2147483647
  %v477 = vsel %vm80, %v471, 2147483647
  %vm478 = vcmp.lt.s32.totalorder %v473, %v477
  %v479 = vsel %vm478, %v473, %v477
  %v480 = vsel %vm80, %v472, 2147483647
  %vm481 = vcmp.lt.s32.totalorder %v474, %v480
  %v482 = vsel %vm481, %v474, %v480
  %vm483 = vcmp.lt.s32.totalorder %v479, %v482
  %v484 = vsel %vm483, %v479, %v482
  %vm485 = vcmp.lt.s32.totalorder %v475, %v476
  %v486 = vsel %vm485, %v475, %v476
  %vm487 = vcmp.lt.s32.totalorder %v484, %v486
  %v488 = vsel %vm487, %v484, %v486
  %s489 = scalar_lea.vmem %s0, 48
  %v490 = vld [vmem:[%s489] sm:$0x3f]
  %v491 = vadd.f32 %v490, %v460
  %vm492 = vcmp.gt.s32.totalorder %v52, 6
  %v493 = vsel %vm492, 1, 0
  %v494 = vperm.slane %v493, 0
  %vm495 = vcmp.eq.s32.totalorder %v494, 1
  %v496 = vsel %vm495, %v488, 0
  %s497 = scalar_lea.vmem [#allocation2], 40
  %498 = vst.msk [vmem:[%s497] sm:$0x3f] %vm80, %v496
  %v499 = vsel %vm495, %v491, %v425
  %v501 = vrot.slane %v491, 1
  %v502 = vrot.slane %v491, 2
  %v503 = vrot.slane %v491, 3
  %v504 = vrot.slane %v491, 4
  %v505 = vrot.slane %v491, 5
  %v506 = vperm.slane %v491, 0
  %v507 = vperm.slane %v501, 0
  %v508 = vperm.slane %v502, 0
  %v509 = vperm.slane %v503, 0
  %v510 = vperm.slane %v504, 0
  %v511 = vperm.slane %v505, 0
  %v518 = vadd.f32 %v23, %v506
  %v519 = vadd.f32 %v28, %v507
  %v520 = vadd.f32 %v33, %v508
  %v521 = vadd.f32 %v38, %v509
  %v522 = vadd.f32 %v43, %v510
  %v523 = vadd.f32 %v48, %v511
  %v524 = vsel %vm80, %v518, -inf
  %v525 = vsel %vm80, %v519, -inf
  %v526 = vsel %vm80, %v520, -inf
  %v527 = vsel %vm80, %v521, -inf
  %v528 = vsel %vm80, %v522, -inf
  %v529 = vmax.f32 %v524, %v528
  %v530 = vsel %vm80, %v523, -inf
  %v531 = vmax.f32 %v525, %v530
  %v532 = vmax.f32 %v529, %v531
  %v533 = vmax.f32 %v526, %v527
  %v534 = vmax.f32 %v532, %v533
  %vm535 = vcmp.eq.f32.partialorder %v518, %v534
  %vm536 = vcmp.eq.f32.partialorder %v519, %v534
  %vm537 = vcmp.eq.f32.partialorder %v520, %v534
  %vm538 = vcmp.eq.f32.partialorder %v521, %v534
  %vm539 = vcmp.eq.f32.partialorder %v522, %v534
  %vm540 = vcmp.eq.f32.partialorder %v523, %v534
  %v541 = vsel %vm535, 0, 6
  %v542 = vsel %vm536, 1, 6
  %v543 = vsel %vm537, 2, 6
  %v544 = vsel %vm538, 3, 6
  %v545 = vsel %vm539, 4, 6
  %v546 = vsel %vm540, 5, 6
  %v547 = vsel %vm80, %v541, 2147483647
  %v548 = vsel %vm80, %v542, 2147483647
  %v549 = vsel %vm80, %v543, 2147483647
  %v550 = vsel %vm80, %v544, 2147483647
  %v551 = vsel %vm80, %v545, 2147483647
  %vm552 = vcmp.lt.s32.totalorder %v547, %v551
  %v553 = vsel %vm552, %v547, %v551
  %v554 = vsel %vm80, %v546, 2147483647
  %vm555 = vcmp.lt.s32.totalorder %v548, %v554
  %v556 = vsel %vm555, %v548, %v554
  %vm557 = vcmp.lt.s32.totalorder %v553, %v556
  %v558 = vsel %vm557, %v553, %v556
  %vm559 = vcmp.lt.s32.totalorder %v549, %v550
  %v560 = vsel %vm559, %v549, %v550
  %vm561 = vcmp.lt.s32.totalorder %v558, %v560
  %v562 = vsel %vm561, %v558, %v560
  %s563 = scalar_lea.vmem %s0, 56
  %v564 = vld [vmem:[%s563] sm:$0x3f]
  %v565 = vadd.f32 %v564, %v534
  %vm566 = vcmp.gt.s32.totalorder %v52, 7
  %v567 = vsel %vm566, 1, 0
  %v568 = vperm.slane %v567, 0
  %vm569 = vcmp.eq.s32.totalorder %v568, 1
  %v570 = vsel %vm569, %v562, 0
  %s571 = scalar_lea.vmem [#allocation2], 48
  %572 = vst.msk [vmem:[%s571] sm:$0x3f] %vm80, %v570
  %v573 = vsel %vm569, %v565, %v499
  %v575 = vrot.slane %v573, 1
  %v576 = vrot.slane %v573, 2
  %v577 = vrot.slane %v573, 3
  %v578 = vrot.slane %v573, 4
  %v579 = vrot.slane %v573, 5
  %v580 = vperm.slane %v573, 0
  %v581 = vperm.slane %v575, 0
  %v582 = vperm.slane %v576, 0
  %v583 = vperm.slane %v577, 0
  %v584 = vperm.slane %v578, 0
  %v585 = vperm.slane %v579, 0
  %v592 = vadd.f32 %v23, %v580
  %v593 = vadd.f32 %v28, %v581
  %v594 = vadd.f32 %v33, %v582
  %v595 = vadd.f32 %v38, %v583
  %v596 = vadd.f32 %v43, %v584
  %v597 = vadd.f32 %v48, %v585
  %vm598 = vcmask 13317
  %v599 = vsel %vm598, %v592, -inf
  %v600 = vsel %vm598, %v593, -inf
  %v601 = vsel %vm598, %v594, -inf
  %v602 = vsel %vm598, %v595, -inf
  %v603 = vsel %vm598, %v596, -inf
  %v604 = vmax.f32 %v599, %v603
  %v605 = vsel %vm598, %v597, -inf
  %v606 = vmax.f32 %v600, %v605
  %v607 = vmax.f32 %v604, %v606
  %v608 = vmax.f32 %v601, %v602
  %v609 = vmax.f32 %v607, %v608
  %vm610 = vcmp.eq.f32.partialorder %v592, %v609
  %vm611 = vcmp.eq.f32.partialorder %v593, %v609
  %vm612 = vcmp.eq.f32.partialorder %v594, %v609
  %vm613 = vcmp.eq.f32.partialorder %v595, %v609
  %vm614 = vcmp.eq.f32.partialorder %v596, %v609
  %vm615 = vcmp.eq.f32.partialorder %v597, %v609
  %v616 = vsel %vm610, 0, 6
  %v617 = vsel %vm611, 1, 6
  %v618 = vsel %vm612, 2, 6
  %v619 = vsel %vm613, 3, 6
  %v620 = vsel %vm614, 4, 6
  %v621 = vsel %vm615, 5, 6
  %v622 = vsel %vm598, %v616, 2147483647
  %v623 = vsel %vm598, %v617, 2147483647
  %v624 = vsel %vm598, %v618, 2147483647
  %v625 = vsel %vm598, %v619, 2147483647
  %v626 = vsel %vm598, %v620, 2147483647
  %vm627 = vcmp.lt.s32.totalorder %v622, %v626
  %v628 = vsel %vm627, %v622, %v626
  %v629 = vsel %vm598, %v621, 2147483647
  %vm630 = vcmp.lt.s32.totalorder %v623, %v629
  %v631 = vsel %vm630, %v623, %v629
  %vm632 = vcmp.lt.s32.totalorder %v628, %v631
  %v633 = vsel %vm632, %v628, %v631
  %vm634 = vcmp.lt.s32.totalorder %v624, %v625
  %v635 = vsel %vm634, %v624, %v625
  %vm636 = vcmp.lt.s32.totalorder %v633, %v635
  %v637 = vsel %vm636, %v633, %v635
  %s638 = scalar_lea.vmem %s3, 7
  %639 = vst.msk [vmem:[%s638 - $0x5] sm:$0x20] %vm598, %v637
  %v640 = vld [vmem:[%s571] sm:$0x3f]
  %v641 = vperm.slane %v637, 5
  %vm642 = vcmp.eq.s32.totalorder %v51, %v641
  %v643 = vsel %vm642, %v640, 0
  %v644 = vsel %vm80, %v643, 0
  %v645 = vrot.slane %v644, 4
  %v646 = vadd.s32 %v644, %v645
  %v647 = vrot.slane %v646, 2
  %v648 = vadd.s32 %v646, %v647
  %v649 = vrot.slane %v648, 1
  %v650 = vadd.s32 %v648, %v649
  %vm651 = vcmp.eq.s32.totalorder %v53, 6
  %652 = vst [vmem:[#allocation1] sm:$0xff] %v637
  %s653 = scalar_lea.vmem [#allocation1], 5
  %v654 = vld [vmem:[%s653] ss:$9 sm:$0xff]
  %v655 = vsel %vm651, %v654, %v650
  %s656 = scalar_lea.vmem %s3, 6
  %vm657 = vcmask 8192
  %658 = vst.msk [vmem:[%s656] sm:$0x1] %vm657, %v655
  %v659 = vld [vmem:[%s497] sm:$0x3f]
  %v660 = vperm.slane %v655, 0
  %vm661 = vcmp.eq.s32.totalorder %v51, %v660
  %v662 = vsel %vm661, %v659, 0
  %v663 = vsel %vm80, %v662, 0
  %v664 = vrot.slane %v663, 4
  %v665 = vadd.s32 %v663, %v664
  %v666 = vrot.slane %v665, 2
  %v667 = vadd.s32 %v665, %v666
  %v668 = vrot.slane %v667, 1
  %v669 = vadd.s32 %v667, %v668
  %vm670 = vcmp.eq.s32.totalorder %v53, 5
  %671 = vst [vmem:[#allocation1] sm:$0xff] %v637
  %s672 = scalar_lea.vmem [#allocation1], 5
  %v673 = vld [vmem:[%s672] ss:$9 sm:$0xff]
  %v674 = vsel %vm670, %v673, %v669
  %s675 = scalar_lea.vmem %s3, 5
  %676 = vst.msk [vmem:[%s675] sm:$0x1] %vm657, %v674
  %v677 = vld [vmem:[%s423] sm:$0x3f]
  %v678 = vperm.slane %v674, 0
  %vm679 = vcmp.eq.s32.totalorder %v51, %v678
  %v680 = vsel %vm679, %v677, 0
  %v681 = vsel %vm80, %v680, 0
  %v682 = vrot.slane %v681, 4
  %v683 = vadd.s32 %v681, %v682
  %v684 = vrot.slane %v683, 2
  %v685 = vadd.s32 %v683, %v684
  %v686 = vrot.slane %v685, 1
  %v687 = vadd.s32 %v685, %v686
  %vm688 = vcmp.eq.s32.totalorder %v53, 4
  %689 = vst [vmem:[#allocation1] sm:$0xff] %v637
  %s690 = scalar_lea.vmem [#allocation1], 5
  %v691 = vld [vmem:[%s690] ss:$9 sm:$0xff]
  %v692 = vsel %vm688, %v691, %v687
  %s693 = scalar_lea.vmem %s3, 4
  %694 = vst.msk [vmem:[%s693] sm:$0x1] %vm657, %v692
  %v695 = vld [vmem:[%s349] sm:$0x3f]
  %v696 = vperm.slane %v692, 0
  %vm697 = vcmp.eq.s32.totalorder %v51, %v696
  %v698 = vsel %vm697, %v695, 0
  %v699 = vsel %vm80, %v698, 0
  %v700 = vrot.slane %v699, 4
  %v701 = vadd.s32 %v699, %v700
  %v702 = vrot.slane %v701, 2
  %v703 = vadd.s32 %v701, %v702
  %v704 = vrot.slane %v703, 1
  %v705 = vadd.s32 %v703, %v704
  %vm706 = vcmp.eq.s32.totalorder %v53, 3
  %707 = vst [vmem:[#allocation1] sm:$0xff] %v637
  %s708 = scalar_lea.vmem [#allocation1], 5
  %v709 = vld [vmem:[%s708] ss:$9 sm:$0xff]
  %v710 = vsel %vm706, %v709, %v705
  %s711 = scalar_lea.vmem %s3, 3
  %712 = vst.msk [vmem:[%s711] sm:$0x1] %vm657, %v710
  %v713 = vld [vmem:[%s275] sm:$0x3f]
  %v714 = vperm.slane %v710, 0
  %vm715 = vcmp.eq.s32.totalorder %v51, %v714
  %v716 = vsel %vm715, %v713, 0
  %v717 = vsel %vm80, %v716, 0
  %v718 = vrot.slane %v717, 4
  %v719 = vadd.s32 %v717, %v718
  %v720 = vrot.slane %v719, 2
  %v721 = vadd.s32 %v719, %v720
  %v722 = vrot.slane %v721, 1
  %v723 = vadd.s32 %v721, %v722
  %vm724 = vcmp.eq.s32.totalorder %v53, 2
  %725 = vst [vmem:[#allocation1] sm:$0xff] %v637
  %s726 = scalar_lea.vmem [#allocation1], 5
  %v727 = vld [vmem:[%s726] ss:$9 sm:$0xff]
  %v728 = vsel %vm724, %v727, %v723
  %s729 = scalar_lea.vmem %s3, 2
  %730 = vst.msk [vmem:[%s729] sm:$0x1] %vm657, %v728
  %v731 = vld [vmem:[%s201] sm:$0x3f]
  %v732 = vperm.slane %v728, 0
  %vm733 = vcmp.eq.s32.totalorder %v51, %v732
  %v734 = vsel %vm733, %v731, 0
  %v735 = vsel %vm80, %v734, 0
  %v736 = vrot.slane %v735, 4
  %v737 = vadd.s32 %v735, %v736
  %v738 = vrot.slane %v737, 2
  %v739 = vadd.s32 %v737, %v738
  %v740 = vrot.slane %v739, 1
  %v741 = vadd.s32 %v739, %v740
  %vm742 = vcmp.eq.s32.totalorder %v53, 1
  %743 = vst [vmem:[#allocation1] sm:$0xff] %v637
  %s744 = scalar_lea.vmem [#allocation1], 5
  %v745 = vld [vmem:[%s744] ss:$9 sm:$0xff]
  %v746 = vsel %vm742, %v745, %v741
  %s747 = scalar_lea.vmem %s3, 1
  %748 = vst.msk [vmem:[%s747] sm:$0x1] %vm657, %v746
  %v749 = vld [vmem:[#allocation2] sm:$0x3f]
  %v750 = vperm.slane %v746, 0
  %vm751 = vcmp.eq.s32.totalorder %v51, %v750
  %v752 = vsel %vm751, %v749, 0
  %v753 = vsel %vm80, %v752, 0
  %v754 = vrot.slane %v753, 4
  %v755 = vadd.s32 %v753, %v754
  %v756 = vrot.slane %v755, 2
  %v757 = vadd.s32 %v755, %v756
  %v758 = vrot.slane %v757, 1
  %v759 = vadd.s32 %v757, %v758
  %vm760 = vcmp.eq.s32.totalorder %v53, 0
  %761 = vst [vmem:[#allocation1] sm:$0xff] %v637
  %s762 = scalar_lea.vmem [#allocation1], 5
  %v763 = vld [vmem:[%s762] ss:$9 sm:$0xff]
  %v764 = vsel %vm760, %v763, %v759
  %765 = vst.msk [vmem:[%s3] sm:$0x1] %vm657, %v764
  // Predicated region
  $region14: #{tpu_custom_call.1} parent=0 // pred_check
    _
  $region15: #{tpu_custom_call.1} parent=0 // pred_check_branch
    %767 = sbr.rel (0) target = $region17
  $region16: #{tpu_custom_call.1} parent=0 // pred_region
    _
  $region17: #{tpu_custom_call.1} parent=0 // pred_fallthru
    _
  // Predicated region
  $region18: #{tpu_custom_call.1} parent=0 // pred_check
    _
  $region19: #{tpu_custom_call.1} parent=0 // pred_check_branch
    %769 = sbr.rel (0) target = $region21
  $region20: #{tpu_custom_call.1} parent=0 // pred_region
    _
  $region21: #{tpu_custom_call.1} parent=0 // pred_fallthru
    _

</llo_original>
